<compile_context>
chip_gen: v7x
topology: tpu7x:2x2x1
jax: 0.10.0
libtpu: 0.0.40
codegen_flags: <defaults>
</compile_context>

<pallas_src>
import jax
import jax.numpy as jnp
from jax import lax
from jax.experimental import pallas as pl
from jax.experimental.pallas import tpu as pltpu


def _round_up(x, m):
    return ((x + m - 1) // m) * m


def _double_q_kernel(s_ref, a_ref, w1s_ref, w1a_ref, b1_ref, b2_ref,
                     w2_ref, w3_ref, b3_ref, out_ref):
    wdt = w1s_ref.dtype  # compute dtype of the matmul inputs (f32 or bf16)

    # Layer 1 (both heads fused along the output dim): state-half + action-half
    # dots summed in-kernel, so the wrapper never materializes concat(s, a).
    h = (jnp.dot(s_ref[...].astype(wdt), w1s_ref[...],
                 preferred_element_type=jnp.float32)
         + jnp.dot(a_ref[...].astype(wdt), w1a_ref[...],
                   preferred_element_type=jnp.float32)
         + b1_ref[...])
    h = jnp.maximum(h, 0.0)

    # Layer 2: split per head at production widths (no zero-block waste),
    # fused block-diagonal at small widths.  Branch is on static ref rank.
    if w2_ref.ndim == 3:
        W = w2_ref.shape[1]  # lane slices at W (multiple of 128) -> no relayout
        h1 = jnp.dot(h[:, :W].astype(wdt), w2_ref[0],
                     preferred_element_type=jnp.float32)
        h2 = jnp.dot(h[:, W:].astype(wdt), w2_ref[1],
                     preferred_element_type=jnp.float32)
        h = jnp.concatenate([h1, h2], axis=1) + b2_ref[...]
    else:
        h = (jnp.dot(h.astype(wdt), w2_ref[...],
                     preferred_element_type=jnp.float32)
             + b2_ref[...])
    h = jnp.maximum(h, 0.0)

    # Layer 3: (2, 2W) head weights contracted against h over the feature dim
    # -> (2, TB) batch-along-lanes result; one unmasked lane-dense store.
    q = lax.dot_general(w3_ref[...], h.astype(wdt),
                        dimension_numbers=(((1,), (1,)), ((), ())),
                        preferred_element_type=jnp.float32)
    out_ref[...] = (q + b3_ref[...]).astype(out_ref.dtype)


def pack_params(params, state_dim, *, param_dtype=jnp.float32,
                split_threshold=128):
    """One-time packing of PyTorch-layout params (weight (out,in), bias (out,)).

    split_threshold: un-fuse layer 2 once net_width >= this (use 128 on v5e,
    256 on v6e/v7x).  param_dtype=jnp.bfloat16 halves weight DMA and uses the
    MXU's native bf16 path on v6e/v7x (keep biases/accumulators in f32).
    """
    w1, b1, w2, b2, w3, b3, w4, b4, w5, b5, w6, b6 = params
    W = w1.shape[0]

    # Layer 1: state/action halves, both heads concatenated along the out dim.
    w1s = jnp.concatenate([w1[:, :state_dim].T, w4[:, :state_dim].T], axis=1)  # (sd, 2W)
    w1a = jnp.concatenate([w1[:, state_dim:].T, w4[:, state_dim:].T], axis=1)  # (ad, 2W)

    # Biases as separate (1, 2W) rows -> plain sublane-broadcast reads.
    b1p = jnp.concatenate([b1, b4]).reshape(1, 2 * W).astype(jnp.float32)
    b2p = jnp.concatenate([b2, b5]).reshape(1, 2 * W).astype(jnp.float32)

    if W >= split_threshold and W % 128 == 0:
        # Un-fused layer 2: (2, W, W) per-head stack (no zero-block waste).
        w2p = jnp.stack([w2.T, w5.T])
    else:
        # Fused block-diagonal (2W, 2W) for small widths.
        w2p = jnp.zeros((2 * W, 2 * W), jnp.float32)
        w2p = w2p.at[:W, :W].set(w2.T).at[W:, W:].set(w5.T)

    # Layer 3 packed as (2, 2W): row 0 -> q1 head, row 1 -> q2 head.
    w3p = jnp.zeros((2, 2 * W), jnp.float32)
    w3p = w3p.at[0, :W].set(w3[0]).at[1, W:].set(w6[0])
    b3p = jnp.stack([b3, b6]).astype(jnp.float32)  # (2, 1)

    cast = lambda x: x.astype(param_dtype)
    return (cast(w1s), cast(w1a), b1p, b2p, cast(w2p), cast(w3p), b3p)


def double_q_critic_forward(state, action, packed, *, tile_b=512):
    """Pallas forward of Double_Q_Critic. Returns (q1, q2), each [B, 1] float32."""
    w1s, w1a, b1p, b2p, w2p, w3p, b3p = packed
    B, sd = state.shape
    ad = action.shape[1]

    # Batch tiling:
    #  - small batches: one sublane-aligned block (unmasked-enough, no overhead)
    #  - larger batches: 128-multiple tiles up to tile_b, with >= 2 grid steps
    #    so the "parallel" batch axis can shard across v7x's two TensorCores.
    if B > 256:
        TB = min(tile_b, max(128, _round_up(pl.cdiv(B, 2), 128)))
    else:
        TB = _round_up(B, 8)
    nb = pl.cdiv(B, TB)
    B_pad = nb * TB
    if B_pad != B:
        pad = B_pad - B
        state = jnp.pad(state, ((0, pad), (0, 0)))
        action = jnp.pad(action, ((0, pad), (0, 0)))

    if w2p.ndim == 3:
        w2_spec = pl.BlockSpec(w2p.shape, lambda i: (0, 0, 0))
    else:
        w2_spec = pl.BlockSpec(w2p.shape, lambda i: (0, 0))

    out = pl.pallas_call(
        _double_q_kernel,
        out_shape=jax.ShapeDtypeStruct((2, B_pad), jnp.float32),
        grid=(nb,),
        in_specs=[
            pl.BlockSpec((TB, sd), lambda i: (i, 0)),        # state tile
            pl.BlockSpec((TB, ad), lambda i: (i, 0)),        # action tile
            pl.BlockSpec(w1s.shape, lambda i: (0, 0)),       # w1 state-half (both heads)
            pl.BlockSpec(w1a.shape, lambda i: (0, 0)),       # w1 action-half (both heads)
            pl.BlockSpec(b1p.shape, lambda i: (0, 0)),       # b1 (both heads)
            pl.BlockSpec(b2p.shape, lambda i: (0, 0)),       # b2 (both heads)
            w2_spec,                                         # layer-2 weights
            pl.BlockSpec(w3p.shape, lambda i: (0, 0)),       # layer-3 weights (2, 2W)
            pl.BlockSpec(b3p.shape, lambda i: (0, 0)),       # layer-3 bias (2, 1)
        ],
        out_specs=pl.BlockSpec((2, TB), lambda i: (0, i)),   # batch along lanes
        compiler_params=pltpu.CompilerParams(
            dimension_semantics=("parallel",)),
    )(state, action, w1s, w1a, b1p, b2p, w2p, w3p, b3p)

    q1 = out[0, :B][:, None]
    q2 = out[1, :B][:, None]
    return q1, q2


def init_params(key, state_dim, action_dim, net_width):
    """Deterministic init matching nn.Linear shapes: weight (out, in), bias (out,)."""
    dims = [
        (net_width, state_dim + action_dim),  # l1
        (net_width, net_width),               # l2
        (1, net_width),                       # l3
        (net_width, state_dim + action_dim),  # l4
        (net_width, net_width),               # l5
        (1, net_width),                       # l6
    ]
    params = []
    for out_d, in_d in dims:
        key, kw, kb = jax.random.split(key, 3)
        bound = 1.0 / jnp.sqrt(in_d)
        w = jax.random.uniform(kw, (out_d, in_d), jnp.float32, -bound, bound)
        b = jax.random.uniform(kb, (out_d,), jnp.float32, -bound, bound)
        params.extend([w, b])
    return tuple(params)


def reference_forward(state, action, params):
    w1, b1, w2, b2, w3, b3, w4, b4, w5, b5, w6, b6 = params
    sa = jnp.concatenate([state, action], axis=1)
    q1 = jnp.maximum(sa @ w1.T + b1, 0.0)
    q1 = jnp.maximum(q1 @ w2.T + b2, 0.0)
    q1 = q1 @ w3.T + b3
    q2 = jnp.maximum(sa @ w4.T + b4, 0.0)
    q2 = jnp.maximum(q2 @ w5.T + b5, 0.0)
    q2 = q2 @ w6.T + b6
    return q1, q2


if __name__ == "__main__":
    key = jax.random.PRNGKey(0)
    kp, ks, ka, kp2, ks2, ka2 = jax.random.split(key, 6)

    # --- Small config: exercises the fused block-diagonal layer-2 path. ---
    state_dim, action_dim, net_width, batch = 16, 8, 32, 8
    params = init_params(kp, state_dim, action_dim, net_width)
    packed = pack_params(params, state_dim)
    state = jax.random.normal(ks, (batch, state_dim), jnp.float32)
    action = jax.random.normal(ka, (batch, action_dim), jnp.float32)

    q1, q2 = double_q_critic_forward(state, action, packed)
    jax.block_until_ready((q1, q2))
    r1, r2 = reference_forward(state, action, params)
    assert q1.shape == (batch, 1) and q2.shape == (batch, 1)
    assert jnp.allclose(q1, r1, atol=1e-4, rtol=1e-4)
    assert jnp.allclose(q2, r2, atol=1e-4, rtol=1e-4)

    # --- Wider config: exercises the split layer-2 path + tiled/padded batch. ---
    state_dim2, action_dim2, net_width2, batch2 = 16, 8, 128, 300
    params2 = init_params(kp2, state_dim2, action_dim2, net_width2)
    packed2 = pack_params(params2, state_dim2)
    state2 = jax.random.normal(ks2, (batch2, state_dim2), jnp.float32)
    action2 = jax.random.normal(ka2, (batch2, action_dim2), jnp.float32)

    q1b, q2b = double_q_critic_forward(state2, action2, packed2)
    jax.block_until_ready((q1b, q2b))
    r1b, r2b = reference_forward(state2, action2, params2)
    assert q1b.shape == (batch2, 1) and q2b.shape == (batch2, 1)
    assert jnp.allclose(q1b, r1b, atol=5e-3, rtol=5e-3)
    assert jnp.allclose(q2b, r2b, atol=5e-3, rtol=5e-3)

    print("KERNEL_OK")
</pallas_src>

<mosaic_0001>
module attributes {stable_mosaic.version = 11 : i64} {
  func.func @_double_q_kernel(%arg0: i32, %arg1: memref<8x16xf32, #tpu.memory_space<vmem>>, %arg2: memref<8x8xf32, #tpu.memory_space<vmem>>, %arg3: memref<16x64xf32, #tpu.memory_space<vmem>>, %arg4: memref<8x64xf32, #tpu.memory_space<vmem>>, %arg5: memref<1x64xf32, #tpu.memory_space<vmem>>, %arg6: memref<1x64xf32, #tpu.memory_space<vmem>>, %arg7: memref<64x64xf32, #tpu.memory_space<vmem>>, %arg8: memref<2x64xf32, #tpu.memory_space<vmem>>, %arg9: memref<2x1xf32, #tpu.memory_space<vmem>>, %arg10: memref<2x8xf32, #tpu.memory_space<vmem>>) attributes {dimension_semantics = [#tpu.dimension_semantics<parallel>], iteration_bounds = array<i64: 1>, scalar_prefetch = 0 : i64, scratch_operands = 0 : i64, tpu.core_type = #tpu.core_type<tc>, window_params = [{transform_indices = @transform_0, window_bounds = array<i64: 8, 16>}, {transform_indices = @transform_1, window_bounds = array<i64: 8, 8>}, {pipeline_mode = #tpu.pipeline_mode<synchronous>, transform_indices = @transform_2, window_bounds = array<i64: 16, 64>}, {pipeline_mode = #tpu.pipeline_mode<synchronous>, transform_indices = @transform_3, window_bounds = array<i64: 8, 64>}, {pipeline_mode = #tpu.pipeline_mode<synchronous>, transform_indices = @transform_4, window_bounds = array<i64: 1, 64>}, {pipeline_mode = #tpu.pipeline_mode<synchronous>, transform_indices = @transform_5, window_bounds = array<i64: 1, 64>}, {pipeline_mode = #tpu.pipeline_mode<synchronous>, transform_indices = @transform_6, window_bounds = array<i64: 64, 64>}, {pipeline_mode = #tpu.pipeline_mode<synchronous>, transform_indices = @transform_7, window_bounds = array<i64: 2, 64>}, {pipeline_mode = #tpu.pipeline_mode<synchronous>, transform_indices = @transform_8, window_bounds = array<i64: 2, 1>}, {transform_indices = @transform_9, window_bounds = array<i64: 2, 8>}]} {
    %c0 = arith.constant 0 : index
    %c0_0 = arith.constant 0 : index
    %0 = vector.load %arg1[%c0, %c0_0] : memref<8x16xf32, #tpu.memory_space<vmem>>, vector<8x16xf32>
    %c0_1 = arith.constant 0 : index
    %c0_2 = arith.constant 0 : index
    %1 = vector.load %arg3[%c0_1, %c0_2] : memref<16x64xf32, #tpu.memory_space<vmem>>, vector<16x64xf32>
    %cst = arith.constant dense<0.000000e+00> : vector<8x64xf32>
    %2 = tpu.matmul %0, %1, %cst {dimension_numbers = #tpu.dot_dimension_numbers<[1], [0], [0], [1], [0, 0, 1, 1], [], []>} : vector<8x16xf32>, vector<16x64xf32>, vector<8x64xf32> -> vector<8x64xf32>
    %c0_3 = arith.constant 0 : index
    %c0_4 = arith.constant 0 : index
    %3 = vector.load %arg2[%c0_3, %c0_4] : memref<8x8xf32, #tpu.memory_space<vmem>>, vector<8x8xf32>
    %c0_5 = arith.constant 0 : index
    %c0_6 = arith.constant 0 : index
    %4 = vector.load %arg4[%c0_5, %c0_6] : memref<8x64xf32, #tpu.memory_space<vmem>>, vector<8x64xf32>
    %cst_7 = arith.constant dense<0.000000e+00> : vector<8x64xf32>
    %5 = tpu.matmul %3, %4, %cst_7 {dimension_numbers = #tpu.dot_dimension_numbers<[1], [0], [0], [1], [0, 0, 1, 1], [], []>} : vector<8x8xf32>, vector<8x64xf32>, vector<8x64xf32> -> vector<8x64xf32>
    %6 = arith.addf %2, %5 : vector<8x64xf32>
    %c0_8 = arith.constant 0 : index
    %c0_9 = arith.constant 0 : index
    %7 = vector.load %arg5[%c0_8, %c0_9] : memref<1x64xf32, #tpu.memory_space<vmem>>, vector<1x64xf32>
    %8 = vector.broadcast %7 : vector<1x64xf32> to vector<8x64xf32>
    %9 = arith.addf %6, %8 : vector<8x64xf32>
    %cst_10 = arith.constant 0.000000e+00 : f32
    %10 = vector.broadcast %cst_10 : f32 to vector<8x64xf32>
    %11 = arith.maximumf %9, %10 : vector<8x64xf32>
    %c0_11 = arith.constant 0 : index
    %c0_12 = arith.constant 0 : index
    %12 = vector.load %arg7[%c0_11, %c0_12] : memref<64x64xf32, #tpu.memory_space<vmem>>, vector<64x64xf32>
    %cst_13 = arith.constant dense<0.000000e+00> : vector<8x64xf32>
    %13 = tpu.matmul %11, %12, %cst_13 {dimension_numbers = #tpu.dot_dimension_numbers<[1], [0], [0], [1], [0, 0, 1, 1], [], []>} : vector<8x64xf32>, vector<64x64xf32>, vector<8x64xf32> -> vector<8x64xf32>
    %c0_14 = arith.constant 0 : index
    %c0_15 = arith.constant 0 : index
    %14 = vector.load %arg6[%c0_14, %c0_15] : memref<1x64xf32, #tpu.memory_space<vmem>>, vector<1x64xf32>
    %15 = vector.broadcast %14 : vector<1x64xf32> to vector<8x64xf32>
    %16 = arith.addf %13, %15 : vector<8x64xf32>
    %cst_16 = arith.constant 0.000000e+00 : f32
    %17 = vector.broadcast %cst_16 : f32 to vector<8x64xf32>
    %18 = arith.maximumf %16, %17 : vector<8x64xf32>
    %c0_17 = arith.constant 0 : index
    %c0_18 = arith.constant 0 : index
    %19 = vector.load %arg8[%c0_17, %c0_18] : memref<2x64xf32, #tpu.memory_space<vmem>>, vector<2x64xf32>
    %cst_19 = arith.constant dense<0.000000e+00> : vector<2x8xf32>
    %20 = tpu.matmul %19, %18, %cst_19 {dimension_numbers = #tpu.dot_dimension_numbers<[1], [1], [0], [0], [0, 0, 1, 0], [], []>} : vector<2x64xf32>, vector<8x64xf32>, vector<2x8xf32> -> vector<2x8xf32>
    %c0_20 = arith.constant 0 : index
    %c0_21 = arith.constant 0 : index
    %21 = vector.load %arg9[%c0_20, %c0_21] : memref<2x1xf32, #tpu.memory_space<vmem>>, vector<2x1xf32>
    %22 = vector.broadcast %21 : vector<2x1xf32> to vector<2x8xf32>
    %23 = arith.addf %20, %22 : vector<2x8xf32>
    %c0_22 = arith.constant 0 : index
    %c0_23 = arith.constant 0 : index
    %24 = vector.load %arg10[%c0_22, %c0_23] : memref<2x8xf32, #tpu.memory_space<vmem>>, vector<2x8xf32>
    tpu.vector_store %arg10[%c0_22, %c0_23], %23 {strides = array<i32>} : memref<2x8xf32, #tpu.memory_space<vmem>>, vector<2x8xf32>,
    return
  }
  func.func @transform_0(%arg0: i32) -> (i32, i32) {
    %c0_i32 = arith.constant 0 : i32
    %c0_i32_0 = arith.constant 0 : i32
    return %arg0, %c0_i32 : i32, i32
  }
  func.func @transform_1(%arg0: i32) -> (i32, i32) {
    %c0_i32 = arith.constant 0 : i32
    %c0_i32_0 = arith.constant 0 : i32
    return %arg0, %c0_i32 : i32, i32
  }
  func.func @transform_2(%arg0: i32) -> (i32, i32) {
    %c0_i32 = arith.constant 0 : i32
    %c0_i32_0 = arith.constant 0 : i32
    %c0_i32_1 = arith.constant 0 : i32
    return %c0_i32, %c0_i32_0 : i32, i32
  }
  func.func @transform_3(%arg0: i32) -> (i32, i32) {
    %c0_i32 = arith.constant 0 : i32
    %c0_i32_0 = arith.constant 0 : i32
    %c0_i32_1 = arith.constant 0 : i32
    return %c0_i32, %c0_i32_0 : i32, i32
  }
  func.func @transform_4(%arg0: i32) -> (i32, i32) {
    %c0_i32 = arith.constant 0 : i32
    %c0_i32_0 = arith.constant 0 : i32
    %c0_i32_1 = arith.constant 0 : i32
    return %c0_i32, %c0_i32_0 : i32, i32
  }
  func.func @transform_5(%arg0: i32) -> (i32, i32) {
    %c0_i32 = arith.constant 0 : i32
    %c0_i32_0 = arith.constant 0 : i32
    %c0_i32_1 = arith.constant 0 : i32
    return %c0_i32, %c0_i32_0 : i32, i32
  }
  func.func @transform_6(%arg0: i32) -> (i32, i32) {
    %c0_i32 = arith.constant 0 : i32
    %c0_i32_0 = arith.constant 0 : i32
    %c0_i32_1 = arith.constant 0 : i32
    return %c0_i32, %c0_i32_0 : i32, i32
  }
  func.func @transform_7(%arg0: i32) -> (i32, i32) {
    %c0_i32 = arith.constant 0 : i32
    %c0_i32_0 = arith.constant 0 : i32
    %c0_i32_1 = arith.constant 0 : i32
    return %c0_i32, %c0_i32_0 : i32, i32
  }
  func.func @transform_8(%arg0: i32) -> (i32, i32) {
    %c0_i32 = arith.constant 0 : i32
    %c0_i32_0 = arith.constant 0 : i32
    %c0_i32_1 = arith.constant 0 : i32
    return %c0_i32, %c0_i32_0 : i32, i32
  }
  func.func @transform_9(%arg0: i32) -> (i32, i32) {
    %c0_i32 = arith.constant 0 : i32
    %c0_i32_0 = arith.constant 0 : i32
    return %c0_i32, %arg0 : i32, i32
  }
}

</mosaic_0001>

<llo_original>
// kernel: tpu_custom_call.1
$region0: #{tpu_custom_call.1}
  #allocation0 [shape = 'u32[]', space=smem, size = 0x4, offset = 0x4, fixed_abs, tag = 'smem constant byte address 0x4 - core index']
  #allocation1 [shape = 'u32[144,128]{1,0:T(1,128)}', space=vmem, size = 0x12000, scoped, tag = 'internal scratch']
  %s0 = inlined_call_operand.hbm [shape: f32[8,16], index: 0, kind: input, shape index: {}]
  %s1 = inlined_call_operand.hbm [shape: f32[8,8], index: 1, kind: input, shape index: {}]
  %s2 = inlined_call_operand.hbm [shape: f32[16,64], index: 2, kind: input, shape index: {}]
  %s3 = inlined_call_operand.vmem [shape: f32[8,64], index: 3, kind: input, shape index: {}]
  %s4 = inlined_call_operand.vmem [shape: f32[1,64], index: 4, kind: input, shape index: {}]
  %s5 = inlined_call_operand.vmem [shape: f32[1,64], index: 5, kind: input, shape index: {}]
  %s6 = inlined_call_operand.hbm [shape: f32[64,64], index: 6, kind: input, shape index: {}]
  %s7 = inlined_call_operand.vmem [shape: f32[2,64], index: 7, kind: input, shape index: {}]
  %s8 = inlined_call_operand.vmem [shape: f32[2,1], index: 8, kind: input, shape index: {}]
  %s9 = inlined_call_operand.hbm [shape: f32[2,8], index: 9, kind: output, shape index: {}]
  %s10 = sld [smem:[#allocation0]]
  $region62: #{tpu_custom_call.1} parent=0
    _
  %s12 = ssub.s32 1, %s10
  %s13 = scalar_select 0, %s12, %s10
  $region1: #{tpu_custom_call.1} parent=0
    #allocation2 [shape = 'u8[4096]{0}', space=vmem, size = 0x1000, scoped, tag = 'input window, operand 0, single buffered']
    #allocation3 [shape = 's32[1]{0}', space=sflag, size = 0x4, scoped, tag = 'scoped memory for tpu_custom_call.1']
    #allocation4 [shape = 's32[1]{0}', space=sflag, size = 0x4, scoped, tag = 'scoped memory for tpu_custom_call.1']
    #allocation5 [shape = 'u8[4096]{0}', space=vmem, size = 0x1000, scoped, tag = 'input window, operand 1, single buffered']
    #allocation6 [shape = 's32[1]{0}', space=sflag, size = 0x4, scoped, tag = 'scoped memory for tpu_custom_call.1']
    #allocation7 [shape = 'u8[8192]{0}', space=vmem, size = 0x2000, scoped, tag = 'input window, operand 2, single buffered']
    #allocation8 [shape = 'u8[32768]{0}', space=vmem, size = 0x8000, scoped, tag = 'input window, operand 6, single buffered']
    #allocation9 [shape = 's32[1]{0}', space=sflag, size = 0x4, scoped, tag = 'scoped memory for tpu_custom_call.1']
    #allocation10 [shape = 'u8[1024]{0}', space=vmem, size = 0x400, scoped, tag = 'output window, operand 0, single buffered']
    %14 = vsyncpa [#allocation3], 0
    %15 = vsyncpa [#allocation6], 0
    %16 = vsyncpa [#allocation9], 0
    %17 = vsyncpa [#allocation4], 0
    // Predicated region
    $region2: #{tpu_custom_call.1} parent=1 // pred_check
      _
    $region3: #{tpu_custom_call.1} parent=1 // pred_check_branch
      %19 = sbr.rel (0) target = $region5
    $region4: #{tpu_custom_call.1} parent=1 // pred_region
      %s21 = ssub.s32 128, 128
      %22 = vsyncadd [#allocation3], %s21
      %s24 = sshll.u32 [#allocation2], 4
      %s25 = int_to_ptr.vmem [resolvable:$true] %s24
      %27 = dma.hbm_to_vmem [thread:$0]  %s0, 128, %s25, [#allocation3]
    $region5: #{tpu_custom_call.1} parent=1 // pred_fallthru
      _
    // Predicated region
    $region6: #{tpu_custom_call.1} parent=1 // pred_check
      _
    $region7: #{tpu_custom_call.1} parent=1 // pred_check_branch
      %29 = sbr.rel (0) target = $region9
    $region8: #{tpu_custom_call.1} parent=1 // pred_region
      %s31 = ssub.s32 128, 128
      %32 = vsyncadd [#allocation6], %s31
      %s34 = sshll.u32 [#allocation5], 4
      %s35 = int_to_ptr.vmem [resolvable:$true] %s34
      %37 = dma.hbm_to_vmem [thread:$0]  %s1, 128, %s35, [#allocation6]
    $region9: #{tpu_custom_call.1} parent=1 // pred_fallthru
      _
    // Predicated region
    $region10: #{tpu_custom_call.1} parent=1 // pred_check
      _
    $region11: #{tpu_custom_call.1} parent=1 // pred_check_branch
      %39 = sbr.rel (0) target = $region13
    $region12: #{tpu_custom_call.1} parent=1 // pred_region
      %s41 = ssub.s32 256, 256
      %42 = vsyncadd [#allocation6], %s41
      %s43 = sshll.u32 [#allocation7], 4
      %s44 = int_to_ptr.vmem [resolvable:$true] %s43
      %49 = dma.hbm_to_vmem [thread:$0]  %s2, 256, %s44, [#allocation6], 128, 128, 8
    $region13: #{tpu_custom_call.1} parent=1 // pred_fallthru
      _
    // Predicated region
    $region14: #{tpu_custom_call.1} parent=1 // pred_check
      _
    $region15: #{tpu_custom_call.1} parent=1 // pred_check_branch
      %51 = sbr.rel (0) target = $region17
    $region16: #{tpu_custom_call.1} parent=1 // pred_region
      _
    $region17: #{tpu_custom_call.1} parent=1 // pred_fallthru
      _
    // Predicated region
    $region18: #{tpu_custom_call.1} parent=1 // pred_check
      _
    $region19: #{tpu_custom_call.1} parent=1 // pred_check_branch
      %53 = sbr.rel (0) target = $region21
    $region20: #{tpu_custom_call.1} parent=1 // pred_region
      _
    $region21: #{tpu_custom_call.1} parent=1 // pred_fallthru
      _
    // Predicated region
    $region22: #{tpu_custom_call.1} parent=1 // pred_check
      _
    $region23: #{tpu_custom_call.1} parent=1 // pred_check_branch
      %55 = sbr.rel (0) target = $region25
    $region24: #{tpu_custom_call.1} parent=1 // pred_region
      _
    $region25: #{tpu_custom_call.1} parent=1 // pred_fallthru
      _
    // Predicated region
    $region26: #{tpu_custom_call.1} parent=1 // pred_check
      _
    $region27: #{tpu_custom_call.1} parent=1 // pred_check_branch
      %57 = sbr.rel (0) target = $region29
    $region28: #{tpu_custom_call.1} parent=1 // pred_region
      %s59 = ssub.s32 1024, 1024
      %60 = vsyncadd [#allocation9], %s59
      %s61 = sshll.u32 [#allocation8], 4
      %s62 = int_to_ptr.vmem [resolvable:$true] %s61
      %67 = dma.hbm_to_vmem [thread:$0]  %s6, 1024, %s62, [#allocation9], 128, 128, 8
    $region29: #{tpu_custom_call.1} parent=1 // pred_fallthru
      _
    // Predicated region
    $region30: #{tpu_custom_call.1} parent=1 // pred_check
      _
    $region31: #{tpu_custom_call.1} parent=1 // pred_check_branch
      %69 = sbr.rel (0) target = $region33
    $region32: #{tpu_custom_call.1} parent=1 // pred_region
      _
    $region33: #{tpu_custom_call.1} parent=1 // pred_fallthru
      _
    // Predicated region
    $region34: #{tpu_custom_call.1} parent=1 // pred_check
      _
    $region35: #{tpu_custom_call.1} parent=1 // pred_check_branch
      %71 = sbr.rel (0) target = $region37
    $region36: #{tpu_custom_call.1} parent=1 // pred_region
      _
    $region37: #{tpu_custom_call.1} parent=1 // pred_fallthru
      _
    // Predicated region
    $region38: #{tpu_custom_call.1} parent=1 // pred_check
      _
    $region39: #{tpu_custom_call.1} parent=1 // pred_check_branch
      %73 = sbr.rel (0) target = $region41
    $region40: #{tpu_custom_call.1} parent=1 // pred_region
      %74 = dma.done [#allocation3], 128
    $region41: #{tpu_custom_call.1} parent=1 // pred_fallthru
      _
    // Predicated region
    $region42: #{tpu_custom_call.1} parent=1 // pred_check
      _
    $region43: #{tpu_custom_call.1} parent=1 // pred_check_branch
      %76 = sbr.rel (0) target = $region45
    $region44: #{tpu_custom_call.1} parent=1 // pred_region
      %77 = dma.done [#allocation6], 128
    $region45: #{tpu_custom_call.1} parent=1 // pred_fallthru
      _
    // Predicated region
    $region46: #{tpu_custom_call.1} parent=1 // pred_check
      _
    $region47: #{tpu_custom_call.1} parent=1 // pred_check_branch
      %79 = sbr.rel (0) target = $region49
    $region48: #{tpu_custom_call.1} parent=1 // pred_region
      %80 = dma.done [#allocation6], 256
    $region49: #{tpu_custom_call.1} parent=1 // pred_fallthru
      _
    // Predicated region
    $region50: #{tpu_custom_call.1} parent=1 // pred_check
      _
    $region51: #{tpu_custom_call.1} parent=1 // pred_check_branch
      %82 = sbr.rel (0) target = $region53
    $region52: #{tpu_custom_call.1} parent=1 // pred_region
      %83 = dma.done [#allocation9], 1024
    $region53: #{tpu_custom_call.1} parent=1 // pred_fallthru
      _
    %v84 = vld [vmem:[#allocation2] sm:$0xff]
    %v85 = vld [vmem:[#allocation7] sm:$0xff]
    %v86 = vld [vmem:[#allocation7 + $0x8] sm:$0xff]
    %v87 = vld [vmem:[#allocation5] sm:$0xff]
    %v88 = vld [vmem:[%s3] sm:$0xff]
    %vm89 = vcmask 64512
    %v91 = vsel %vm89, %v87, 0
    %93 = vmatprep.subr.mxu0 0.0
    %94 = vmatpush1.msra.mxu0 %v88
    %95 = vmatprep.subr.mxu0 0.0
    %96 = vmatpush1.msra.mxu0 0.0
    %97 = vmatprep.subr.mxu0 0.0
    %98 = vmatpush1.msra.mxu0 0.0
    %99 = vmatprep.subr.mxu0 0.0
    %100 = vmatpush1.msra.mxu0 0.0
    %101 = vmatprep.subr.mxu0 0.0
    %102 = vmatpush1.msra.mxu0 0.0
    %103 = vmatprep.subr.mxu0 0.0
    %104 = vmatpush1.msra.mxu0 0.0
    %105 = vmatprep.subr.mxu0 0.0
    %106 = vmatpush1.msra.mxu0 0.0
    %107 = vmatprep.subr.mxu0 0.0
    %108 = vmatpush1.msra.mxu0 0.0
    %109 = vmatprep.subr.mxu0 0.0
    %110 = vmatpush1.msra.mxu0 0.0
    %111 = vmatprep.subr.mxu0 0.0
    %112 = vmatpush1.msra.mxu0 0.0
    %113 = vmatprep.subr.mxu0 0.0
    %114 = vmatpush1.msra.mxu0 0.0
    %115 = vmatprep.subr.mxu0 0.0
    %116 = vmatpush1.msra.mxu0 0.0
    %117 = vmatprep.subr.mxu0 0.0
    %118 = vmatpush1.msra.mxu0 0.0
    %119 = vmatprep.subr.mxu0 0.0
    %120 = vmatpush1.msra.mxu0 0.0
    %121 = vmatprep.subr.mxu0 0.0
    %122 = vmatpush1.msra.mxu0 0.0
    %123 = vmatprep.subr.mxu0 0.0
    %124 = vmatpush1.msra.mxu0 0.0
    %125 = vmatprep.subr.mxu0 0.0
    %126 = vmatpush1.msra.mxu0 0.0
    %127 = vmatprep.subr.mxu0 0.0
    %128 = vmatpush1.msra.mxu0 0.0
    %129 = vmatprep.subr.mxu0 0.0
    %130 = vmatpush1.msra.mxu0 0.0
    %131 = vmatprep.subr.mxu0 0.0
    %132 = vmatpush1.msra.mxu0 0.0
    %133 = vmatprep.subr.mxu0 0.0
    %134 = vmatpush1.msra.mxu0 0.0
    %135 = vmatprep.subr.mxu0 0.0
    %136 = vmatpush1.msra.mxu0 0.0
    %137 = vmatprep.subr.mxu0 0.0
    %138 = vmatpush1.msra.mxu0 0.0
    %139 = vmatprep.subr.mxu0 0.0
    %140 = vmatpush1.msra.mxu0 0.0
    %141 = vmatprep.subr.mxu0 0.0
    %142 = vmatpush1.msra.mxu0 0.0
    %143 = vmatprep.subr.mxu0 0.0
    %144 = vmatpush1.msra.mxu0 0.0
    %145 = vmatprep.subr.mxu0 0.0
    %146 = vmatpush1.msra.mxu0 0.0
    %147 = vmatprep.subr.mxu0 0.0
    %148 = vmatpush1.msra.mxu0 0.0
    %149 = vmatprep.subr.mxu0 0.0
    %150 = vmatpush1.msra.mxu0 0.0
    %151 = vmatprep.subr.mxu0 0.0
    %152 = vmatpush1.msra.mxu0 0.0
    %153 = vmatprep.subr.mxu0 0.0
    %154 = vmatpush1.msra.mxu0 0.0
    %155 = vmatprep.subr.mxu0 0.0
    %156 = vmatpush1.msra.mxu0 0.0
    %157 = vmatprep.mubr.f32.mxu0 0.0
    %158 = vmatmul.mubr.f32.gmra.mrb[0].mxu0 %v91
    %v159 = vpop.f32.mrb[0].mxu0
    %v160 = vadd.f32 0.0, %v159
    %v161 = vpop.f32.mrb[0].mxu0
    %162 = vdwg.mxu0
    %vm163 = vcmask 130048
    %v165 = vsel %vm163, %v84, 0
    %167 = vmatprep.subr.mxu0 0.0
    %168 = vmatpush1.msra.mxu0 %v85
    %169 = vmatprep.subr.mxu0 0.0
    %170 = vmatpush1.msra.mxu0 %v86
    %171 = vmatprep.subr.mxu0 0.0
    %172 = vmatpush1.msra.mxu0 0.0
    %173 = vmatprep.subr.mxu0 0.0
    %174 = vmatpush1.msra.mxu0 0.0
    %175 = vmatprep.subr.mxu0 0.0
    %176 = vmatpush1.msra.mxu0 0.0
    %177 = vmatprep.subr.mxu0 0.0
    %178 = vmatpush1.msra.mxu0 0.0
    %179 = vmatprep.subr.mxu0 0.0
    %180 = vmatpush1.msra.mxu0 0.0
    %181 = vmatprep.subr.mxu0 0.0
    %182 = vmatpush1.msra.mxu0 0.0
    %183 = vmatprep.subr.mxu0 0.0
    %184 = vmatpush1.msra.mxu0 0.0
    %185 = vmatprep.subr.mxu0 0.0
    %186 = vmatpush1.msra.mxu0 0.0
    %187 = vmatprep.subr.mxu0 0.0
    %188 = vmatpush1.msra.mxu0 0.0
    %189 = vmatprep.subr.mxu0 0.0
    %190 = vmatpush1.msra.mxu0 0.0
    %191 = vmatprep.subr.mxu0 0.0
    %192 = vmatpush1.msra.mxu0 0.0
    %193 = vmatprep.subr.mxu0 0.0
    %194 = vmatpush1.msra.mxu0 0.0
    %195 = vmatprep.subr.mxu0 0.0
    %196 = vmatpush1.msra.mxu0 0.0
    %197 = vmatprep.subr.mxu0 0.0
    %198 = vmatpush1.msra.mxu0 0.0
    %199 = vmatprep.subr.mxu0 0.0
    %200 = vmatpush1.msra.mxu0 0.0
    %201 = vmatprep.subr.mxu0 0.0
    %202 = vmatpush1.msra.mxu0 0.0
    %203 = vmatprep.subr.mxu0 0.0
    %204 = vmatpush1.msra.mxu0 0.0
    %205 = vmatprep.subr.mxu0 0.0
    %206 = vmatpush1.msra.mxu0 0.0
    %207 = vmatprep.subr.mxu0 0.0
    %208 = vmatpush1.msra.mxu0 0.0
    %209 = vmatprep.subr.mxu0 0.0
    %210 = vmatpush1.msra.mxu0 0.0
    %211 = vmatprep.subr.mxu0 0.0
    %212 = vmatpush1.msra.mxu0 0.0
    %213 = vmatprep.subr.mxu0 0.0
    %214 = vmatpush1.msra.mxu0 0.0
    %215 = vmatprep.subr.mxu0 0.0
    %216 = vmatpush1.msra.mxu0 0.0
    %217 = vmatprep.subr.mxu0 0.0
    %218 = vmatpush1.msra.mxu0 0.0
    %219 = vmatprep.subr.mxu0 0.0
    %220 = vmatpush1.msra.mxu0 0.0
    %221 = vmatprep.subr.mxu0 0.0
    %222 = vmatpush1.msra.mxu0 0.0
    %223 = vmatprep.subr.mxu0 0.0
    %224 = vmatpush1.msra.mxu0 0.0
    %225 = vmatprep.subr.mxu0 0.0
    %226 = vmatpush1.msra.mxu0 0.0
    %227 = vmatprep.subr.mxu0 0.0
    %228 = vmatpush1.msra.mxu0 0.0
    %229 = vmatprep.subr.mxu0 0.0
    %230 = vmatpush1.msra.mxu0 0.0
    %231 = vmatprep.mubr.f32.mxu0 0.0
    %232 = vmatmul.mubr.f32.gmra.mrb[0].mxu0 %v165
    %v233 = vpop.f32.mrb[0].mxu0
    %v234 = vadd.f32 %v160, %v233
    %v235 = vpop.f32.mrb[0].mxu0
    %236 = vdwg.mxu0
    %v237 = vld [vmem:[%s4] sm:$0x1]
    %v239 = vlaneseq
    %v240 = vshrl.u32 %v239, 7
    %v241 = vsub.s32 0, %v240
    %v242 = vrot.slane %v237, %v241
    %v244 = vadd.f32 %v234, %v242
    %v245 = vmax.f32 %v244, 0.0
    %v246 = vld [vmem:[#allocation8] sm:$0xff]
    %v247 = vld [vmem:[#allocation8 + $0x8] sm:$0xff]
    %v248 = vld [vmem:[#allocation8 + $0x10] sm:$0xff]
    %v249 = vld [vmem:[#allocation8 + $0x18] sm:$0xff]
    %v250 = vld [vmem:[#allocation8 + $0x20] sm:$0xff]
    %v251 = vld [vmem:[#allocation8 + $0x28] sm:$0xff]
    %v252 = vld [vmem:[#allocation8 + $0x30] sm:$0xff]
    %v253 = vld [vmem:[#allocation8 + $0x38] sm:$0xff]
    %v254 = vld [vmem:[%s5] sm:$0x1]
    %v256 = vlaneseq
    %v257 = vshrl.u32 %v256, 7
    %v258 = vsub.s32 0, %v257
    %v259 = vrot.slane %v254, %v258
    %vm261 = vcmask 523264
    %v263 = vsel %vm261, %v245, 0
    %265 = vmatprep.subr.mxu0 0.0
    %266 = vmatpush1.msra.mxu0 %v246
    %267 = vmatprep.subr.mxu0 0.0
    %268 = vmatpush1.msra.mxu0 %v247
    %269 = vmatprep.subr.mxu0 0.0
    %270 = vmatpush1.msra.mxu0 %v248
    %271 = vmatprep.subr.mxu0 0.0
    %272 = vmatpush1.msra.mxu0 %v249
    %273 = vmatprep.subr.mxu0 0.0
    %274 = vmatpush1.msra.mxu0 %v250
    %275 = vmatprep.subr.mxu0 0.0
    %276 = vmatpush1.msra.mxu0 %v251
    %277 = vmatprep.subr.mxu0 0.0
    %278 = vmatpush1.msra.mxu0 %v252
    %279 = vmatprep.subr.mxu0 0.0
    %280 = vmatpush1.msra.mxu0 %v253
    %281 = vmatprep.subr.mxu0 0.0
    %282 = vmatpush1.msra.mxu0 0.0
    %283 = vmatprep.subr.mxu0 0.0
    %284 = vmatpush1.msra.mxu0 0.0
    %285 = vmatprep.subr.mxu0 0.0
    %286 = vmatpush1.msra.mxu0 0.0
    %287 = vmatprep.subr.mxu0 0.0
    %288 = vmatpush1.msra.mxu0 0.0
    %289 = vmatprep.subr.mxu0 0.0
    %290 = vmatpush1.msra.mxu0 0.0
    %291 = vmatprep.subr.mxu0 0.0
    %292 = vmatpush1.msra.mxu0 0.0
    %293 = vmatprep.subr.mxu0 0.0
    %294 = vmatpush1.msra.mxu0 0.0
    %295 = vmatprep.subr.mxu0 0.0
    %296 = vmatpush1.msra.mxu0 0.0
    %297 = vmatprep.subr.mxu0 0.0
    %298 = vmatpush1.msra.mxu0 0.0
    %299 = vmatprep.subr.mxu0 0.0
    %300 = vmatpush1.msra.mxu0 0.0
    %301 = vmatprep.subr.mxu0 0.0
    %302 = vmatpush1.msra.mxu0 0.0
    %303 = vmatprep.subr.mxu0 0.0
    %304 = vmatpush1.msra.mxu0 0.0
    %305 = vmatprep.subr.mxu0 0.0
    %306 = vmatpush1.msra.mxu0 0.0
    %307 = vmatprep.subr.mxu0 0.0
    %308 = vmatpush1.msra.mxu0 0.0
    %309 = vmatprep.subr.mxu0 0.0
    %310 = vmatpush1.msra.mxu0 0.0
    %311 = vmatprep.subr.mxu0 0.0
    %312 = vmatpush1.msra.mxu0 0.0
    %313 = vmatprep.subr.mxu0 0.0
    %314 = vmatpush1.msra.mxu0 0.0
    %315 = vmatprep.subr.mxu0 0.0
    %316 = vmatpush1.msra.mxu0 0.0
    %317 = vmatprep.subr.mxu0 0.0
    %318 = vmatpush1.msra.mxu0 0.0
    %319 = vmatprep.subr.mxu0 0.0
    %320 = vmatpush1.msra.mxu0 0.0
    %321 = vmatprep.subr.mxu0 0.0
    %322 = vmatpush1.msra.mxu0 0.0
    %323 = vmatprep.subr.mxu0 0.0
    %324 = vmatpush1.msra.mxu0 0.0
    %325 = vmatprep.subr.mxu0 0.0
    %326 = vmatpush1.msra.mxu0 0.0
    %327 = vmatprep.subr.mxu0 0.0
    %328 = vmatpush1.msra.mxu0 0.0
    %329 = vmatprep.mubr.f32.mxu0 0.0
    %330 = vmatmul.mubr.f32.gmra.mrb[0].mxu0 %v263
    %v331 = vpop.f32.mrb[0].mxu0
    %v332 = vadd.f32 %v259, %v331
    %v333 = vpop.f32.mrb[0].mxu0
    %334 = vdwg.mxu0
    %v335 = vmax.f32 %v332, 0.0
    %v336 = vld [vmem:[%s7] sm:$0x3]
    %v337 = vld [vmem:[%s8] sm:$0x3]
    %339 = vset.pattern.permute.xlu0 0
    %340 = vperm.xlu0 %339, %v337
    %v341 = vpop.permute.xlu0 %340
    %v344 = vsel %vm261, %v336, 0
    %v347 = vsel %vm261, %v335, 0
    %349 = vmatprep.subr.mxu0 0.0
    %350 = vmatpush1.xpose.msra.mxu0 %v347
    %351 = vmatprep.subr.mxu0 0.0
    %352 = vmatpush1.xpose.msra.mxu0 0.0
    %353 = vmatprep.subr.mxu0 0.0
    %354 = vmatpush1.xpose.msra.mxu0 0.0
    %355 = vmatprep.subr.mxu0 0.0
    %356 = vmatpush1.xpose.msra.mxu0 0.0
    %357 = vmatprep.subr.mxu0 0.0
    %358 = vmatpush1.xpose.msra.mxu0 0.0
    %359 = vmatprep.subr.mxu0 0.0
    %360 = vmatpush1.xpose.msra.mxu0 0.0
    %361 = vmatprep.subr.mxu0 0.0
    %362 = vmatpush1.xpose.msra.mxu0 0.0
    %363 = vmatprep.subr.mxu0 0.0
    %364 = vmatpush1.xpose.msra.mxu0 0.0
    %365 = vmatprep.subr.mxu0 0.0
    %366 = vmatpush1.xpose.msra.mxu0 0.0
    %367 = vmatprep.subr.mxu0 0.0
    %368 = vmatpush1.xpose.msra.mxu0 0.0
    %369 = vmatprep.subr.mxu0 0.0
    %370 = vmatpush1.xpose.msra.mxu0 0.0
    %371 = vmatprep.subr.mxu0 0.0
    %372 = vmatpush1.xpose.msra.mxu0 0.0
    %373 = vmatprep.subr.mxu0 0.0
    %374 = vmatpush1.xpose.msra.mxu0 0.0
    %375 = vmatprep.subr.mxu0 0.0
    %376 = vmatpush1.xpose.msra.mxu0 0.0
    %377 = vmatprep.subr.mxu0 0.0
    %378 = vmatpush1.xpose.msra.mxu0 0.0
    %379 = vmatprep.subr.mxu0 0.0
    %380 = vmatpush1.xpose.msra.mxu0 0.0
    %381 = vmatprep.subr.mxu0 0.0
    %382 = vmatpush1.xpose.msra.mxu0 0.0
    %383 = vmatprep.subr.mxu0 0.0
    %384 = vmatpush1.xpose.msra.mxu0 0.0
    %385 = vmatprep.subr.mxu0 0.0
    %386 = vmatpush1.xpose.msra.mxu0 0.0
    %387 = vmatprep.subr.mxu0 0.0
    %388 = vmatpush1.xpose.msra.mxu0 0.0
    %389 = vmatprep.subr.mxu0 0.0
    %390 = vmatpush1.xpose.msra.mxu0 0.0
    %391 = vmatprep.subr.mxu0 0.0
    %392 = vmatpush1.xpose.msra.mxu0 0.0
    %393 = vmatprep.subr.mxu0 0.0
    %394 = vmatpush1.xpose.msra.mxu0 0.0
    %395 = vmatprep.subr.mxu0 0.0
    %396 = vmatpush1.xpose.msra.mxu0 0.0
    %397 = vmatprep.subr.mxu0 0.0
    %398 = vmatpush1.xpose.msra.mxu0 0.0
    %399 = vmatprep.subr.mxu0 0.0
    %400 = vmatpush1.xpose.msra.mxu0 0.0
    %401 = vmatprep.subr.mxu0 0.0
    %402 = vmatpush1.xpose.msra.mxu0 0.0
    %403 = vmatprep.subr.mxu0 0.0
    %404 = vmatpush1.xpose.msra.mxu0 0.0
    %405 = vmatprep.subr.mxu0 0.0
    %406 = vmatpush1.xpose.msra.mxu0 0.0
    %407 = vmatprep.subr.mxu0 0.0
    %408 = vmatpush1.xpose.msra.mxu0 0.0
    %409 = vmatprep.subr.mxu0 0.0
    %410 = vmatpush1.xpose.msra.mxu0 0.0
    %411 = vmatprep.subr.mxu0 0.0
    %412 = vmatpush1.xpose.msra.mxu0 0.0
    %413 = vmatprep.mubr.f32.mxu0 0.0
    %414 = vmatmul.mubr.f32.gmra.mrb[0].mxu0 %v344
    %v415 = vpop.f32.mrb[0].mxu0
    %v416 = vadd.f32 %v341, %v415
    %v417 = vpop.f32.mrb[0].mxu0
    %418 = vdwg.mxu0
    %vm419 = vcmask 58368
    %420 = vst.msk [vmem:[#allocation10] sm:$0x3] %vm419, %v416
    // Predicated region
    $region54: #{tpu_custom_call.1} parent=1 // pred_check
      _
    $region55: #{tpu_custom_call.1} parent=1 // pred_check_branch
      %422 = sbr.rel (0) target = $region57
    $region56: #{tpu_custom_call.1} parent=1 // pred_region
      %s424 = ssub.s32 32, 32
      %425 = vsyncadd [#allocation4], %s424
      %s427 = sshll.u32 [#allocation10], 4
      %s428 = int_to_ptr.vmem [resolvable:$true] %s427
      %430 = dma.vmem_to_hbm [thread:$0]  %s428, 32, %s9, [#allocation4]
    $region57: #{tpu_custom_call.1} parent=1 // pred_fallthru
      _
    // Predicated region
    $region58: #{tpu_custom_call.1} parent=1 // pred_check
      _
    $region59: #{tpu_custom_call.1} parent=1 // pred_check_branch
      %432 = sbr.rel (0) target = $region61
    $region60: #{tpu_custom_call.1} parent=1 // pred_region
      %433 = dma.done [#allocation4], 32
    $region61: #{tpu_custom_call.1} parent=1 // pred_fallthru
      _
    %434 = vsyncpa [#allocation3], 1
    %435 = vsyncpa [#allocation6], 1
    %436 = vsyncpa [#allocation9], 1
    %437 = vsyncpa [#allocation4], 1

</llo_original>
